<compile_context>
chip_gen: v6e
topology: v6e:2x2x1
jax: 0.10.0
libtpu: 0.0.40
codegen_flags: <defaults>
</compile_context>

<pallas_src>
import functools

import jax
import jax.numpy as jnp
from jax.experimental import pallas as pl
from jax.experimental.pallas import tpu as pltpu


# -----------------------------------------------------------------------------
# Pallas kernel
# -----------------------------------------------------------------------------
def _resblock_kernel(x_ref, w1_ref, b1_ref, w2_ref, b2_ref, out_ref,
                     stack_hi_ref, stack_lo_ref, *,
                     height, width, roll_forward):
    # x_ref        : (1, C, HW)   input features, channel-first, HW on lanes
    # w*_ref       : (2, C, 9C)   bf16 fused conv weights: [0]=hi, [1]=lo,
    #                             column index = tap*C + ci, tap = ky*3 + kx
    #                             (res_scale already folded into w2/b2)
    # b*_ref       : (C, 1)       f32 conv biases
    # out_ref      : (1, C, HW)
    # stack_*_ref  : (9C, HW)     bf16 VMEM scratch: hi/lo halves of the 9
    #                             shifted copies of the conv input
    x = x_ref[0]                                     # (C, HW) f32
    c, hw = x.shape

    # ---- border-validity masks: computed once, reused by both convs --------
    lane = jax.lax.broadcasted_iota(jnp.int32, (c, hw), 1)
    row = lane // width
    col = lane % width
    row_up_ok = row >= 1                 # needed when oy == -1
    row_dn_ok = row < height - 1         # needed when oy == +1
    col_lf_ok = col >= 1                 # needed when ox == -1
    col_rt_ok = col < width - 1          # needed when ox == +1

    def tap_mask(oy, ox):
        m = None
        if oy == -1:
            m = row_up_ok
        elif oy == 1:
            m = row_dn_ok
        if ox == -1:
            m = col_lf_ok if m is None else (m & col_lf_ok)
        elif ox == 1:
            m = col_rt_ok if m is None else (m & col_rt_ok)
        return m

    def shifted(inp, oy, ox):
        # value at output pixel p taken from input pixel p + oy*W + ox,
        # zero outside the image (Conv2d zero padding, padding=1).
        s = oy * width + ox
        if s == 0:
            v = inp
        else:
            amt = (-s) % hw if roll_forward else s % hw
            v = pltpu.roll(inp, shift=amt, axis=1)   # cheap XLU lane rotation
        m = tap_mask(oy, ox)
        return v if m is None else jnp.where(m, v, 0.0)

    def conv3x3(inp, w_ref, b_ref):
        # Build the (9C, HW) stacked operand (hi/lo bf16 halves) once, then a
        # single large-K contraction per pass of the bf16x3 scheme.
        for oy in (-1, 0, 1):                        # static 3x3 tap loop
            for ox in (-1, 0, 1):
                tap = (oy + 1) * 3 + (ox + 1)
                v = shifted(inp, oy, ox)             # (C, HW) f32
                hi = v.astype(jnp.bfloat16)
                lo = (v - hi.astype(jnp.float32)).astype(jnp.bfloat16)
                stack_hi_ref[pl.ds(tap * c, c), :] = hi
                stack_lo_ref[pl.ds(tap * c, c), :] = lo
        s_hi = stack_hi_ref[...]                     # (9C, HW) bf16
        s_lo = stack_lo_ref[...]
        w_hi = w_ref[0]                              # (C, 9C) bf16
        w_lo = w_ref[1]
        # bf16x3: hi*hi + hi*lo + lo*hi, accumulated in f32 (lo*lo dropped).
        acc = jnp.dot(w_hi, s_hi, preferred_element_type=jnp.float32)
        acc = acc + jnp.dot(w_hi, s_lo, preferred_element_type=jnp.float32)
        acc = acc + jnp.dot(w_lo, s_hi, preferred_element_type=jnp.float32)
        return acc + b_ref[...]                      # (C,1) broadcasts over HW

    h1 = jnp.maximum(conv3x3(x, w1_ref, b1_ref), 0.0)    # conv1 + ReLU  (f32)
    out = x + conv3x3(h1, w2_ref, b2_ref)                # conv2 (res_scale folded) + identity
    out_ref[0] = out.astype(out_ref.dtype)               # lane-dense store


# -----------------------------------------------------------------------------
# One-time probe: resolve pltpu.roll rotation direction (robust across
# backend versions); called eagerly, result is a static Python bool.
# -----------------------------------------------------------------------------
@functools.lru_cache(maxsize=1)
def _pltpu_roll_is_forward():
    def probe(x_ref, o_ref):
        o_ref[...] = pltpu.roll(x_ref[...], shift=1, axis=1)

    x = jnp.broadcast_to(jax.lax.iota(jnp.float32, 128), (8, 128))
    y = pl.pallas_call(
        probe, out_shape=jax.ShapeDtypeStruct((8, 128), jnp.float32))(x)
    # np.roll semantics (element i -> i+shift) puts x[...,127] at lane 0.
    return bool(y[0, 0] == 127.0)


# -----------------------------------------------------------------------------
# Wrapper
# -----------------------------------------------------------------------------
def residual_block_no_bn(x, conv1_w, conv1_b, conv2_w, conv2_b, res_scale=1.0):
    """Forward of ResidualBlockNoBN0: x + res_scale * conv2(relu(conv1(x)))."""
    n, c, h, w = x.shape
    hw = h * w
    assert hw % 128 == 0 and c % 8 == 0, "demo shapes must be lane/sublane aligned"

    x_flat = x.reshape(n, c, hw).astype(jnp.float32)

    def fuse_split(wt, scale):
        # (C_out, C_in, 3, 3) -> (C_out, 9*C_in), col = (ky*3+kx)*C_in + ci,
        # then hi/lo bf16 split for the bf16x3 matmul scheme.
        wf = jnp.transpose(wt, (0, 2, 3, 1)).reshape(c, 9 * c).astype(jnp.float32)
        wf = wf * jnp.float32(scale)
        hi = wf.astype(jnp.bfloat16)
        lo = (wf - hi.astype(jnp.float32)).astype(jnp.bfloat16)
        return jnp.stack([hi, lo])                   # (2, C, 9C) bf16

    w1 = fuse_split(conv1_w, 1.0)
    b1 = conv1_b.reshape(c, 1).astype(jnp.float32)
    # Fold res_scale into conv2 (exact in f32; removes an in-kernel multiply).
    w2 = fuse_split(conv2_w, res_scale)
    b2 = (conv2_b.astype(jnp.float32) * jnp.float32(res_scale)).reshape(c, 1)

    kernel = functools.partial(
        _resblock_kernel, height=h, width=w,
        roll_forward=_pltpu_roll_is_forward())

    out_flat = pl.pallas_call(
        kernel,
        out_shape=jax.ShapeDtypeStruct((n, c, hw), jnp.float32),
        grid_spec=pltpu.PrefetchScalarGridSpec(
            num_scalar_prefetch=0,
            grid=(n,),
            in_specs=[
                pl.BlockSpec((1, c, hw), lambda i: (i, 0, 0)),
                pl.BlockSpec((2, c, 9 * c), lambda i: (0, 0, 0)),
                pl.BlockSpec((c, 1), lambda i: (0, 0)),
                pl.BlockSpec((2, c, 9 * c), lambda i: (0, 0, 0)),
                pl.BlockSpec((c, 1), lambda i: (0, 0)),
            ],
            out_specs=pl.BlockSpec((1, c, hw), lambda i: (i, 0, 0)),
            scratch_shapes=[
                pltpu.VMEM((9 * c, hw), jnp.bfloat16),   # stacked taps (hi)
                pltpu.VMEM((9 * c, hw), jnp.bfloat16),   # stacked taps (lo)
            ],
        ),
        compiler_params=pltpu.CompilerParams(
            dimension_semantics=("parallel",),
            # ~2 MiB actually used at demo size; re-derive per generation
            # (<= ~56 MiB on v7x, up to ~100 MiB on v6e) once HW is row-tiled.
            vmem_limit_bytes=48 * 1024 * 1024),
    )(x_flat, w1, b1, w2, b2)

    return out_flat.reshape(n, c, h, w)


# -----------------------------------------------------------------------------
# Pure-JAX reference (mirrors the PyTorch forward)
# -----------------------------------------------------------------------------
def residual_block_reference(x, w1, b1, w2, b2, res_scale=1.0):
    dn = ('NCHW', 'OIHW', 'NCHW')
    y = jax.lax.conv_general_dilated(
        x, w1, window_strides=(1, 1), padding=((1, 1), (1, 1)),
        dimension_numbers=dn, precision=jax.lax.Precision.HIGHEST)
    y = jnp.maximum(y + b1.reshape(1, -1, 1, 1), 0.0)
    y = jax.lax.conv_general_dilated(
        y, w2, window_strides=(1, 1), padding=((1, 1), (1, 1)),
        dimension_numbers=dn, precision=jax.lax.Precision.HIGHEST)
    y = y + b2.reshape(1, -1, 1, 1)
    return x + y * res_scale


if __name__ == "__main__":
    n, c, h, w = 2, 64, 16, 16          # mid_channels=64 (module default)
    res_scale = 1.0
    key = jax.random.PRNGKey(0)
    k = jax.random.split(key, 5)

    x = jax.random.normal(k[0], (n, c, h, w), jnp.float32)
    conv1_w = 0.1 * jax.random.normal(k[1], (c, c, 3, 3), jnp.float32)
    conv1_b = 0.01 * jax.random.normal(k[2], (c,), jnp.float32)
    conv2_w = 0.1 * jax.random.normal(k[3], (c, c, 3, 3), jnp.float32)
    conv2_b = 0.01 * jax.random.normal(k[4], (c,), jnp.float32)

    out = residual_block_no_bn(x, conv1_w, conv1_b, conv2_w, conv2_b, res_scale)
    out = jax.block_until_ready(out)

    ref = residual_block_reference(x, conv1_w, conv1_b, conv2_w, conv2_b,
                                   res_scale)
    assert out.shape == (n, c, h, w)
    max_err = jnp.max(jnp.abs(out - ref))
    assert jnp.allclose(out, ref, atol=1e-3, rtol=1e-3), (
        f"mismatch vs reference, max abs err = {max_err}")

    print("KERNEL_OK")
</pallas_src>

<mosaic_0001>
module attributes {stable_mosaic.version = 11 : i64} {
  func.func @probe(%arg0: memref<8x128xf32, #tpu.memory_space<vmem>>, %arg1: memref<8x128xf32, #tpu.memory_space<vmem>>) attributes {dimension_semantics = [], scalar_prefetch = 0 : i64, scratch_operands = 0 : i64, tpu.core_type = #tpu.core_type<tc>} {
    %c0 = arith.constant 0 : index
    %c0_0 = arith.constant 0 : index
    %0 = vector.load %arg0[%c0, %c0_0] : memref<8x128xf32, #tpu.memory_space<vmem>>, vector<8x128xf32>
    %c1_i32 = arith.constant 1 : i32
    %1 = tpu.dynamic_rotate %0 by %c1_i32 dim 1 : vector<8x128xf32>, i32 -> vector<8x128xf32>
    %c0_1 = arith.constant 0 : index
    %c0_2 = arith.constant 0 : index
    %2 = vector.load %arg1[%c0_1, %c0_2] : memref<8x128xf32, #tpu.memory_space<vmem>>, vector<8x128xf32>
    tpu.vector_store %arg1[%c0_1, %c0_2], %1 {strides = array<i32>} : memref<8x128xf32, #tpu.memory_space<vmem>>, vector<8x128xf32>,
    return
  }
}

</mosaic_0001>

<llo_original>
// kernel: tpu_custom_call.1
$region0: #{tpu_custom_call.1}
  #allocation0 [shape = 'u32[]', space=smem, size = 0x4, offset = 0x4, fixed_abs, tag = 'smem constant byte address 0x4 - core index']
  #allocation1 [shape = 'u32[144,128]{1,0:T(1,128)}', space=vmem, size = 0x12000, scoped, tag = 'internal scratch']
  %s0 = inlined_call_operand.hbm [shape: f32[8,128], index: 0, kind: input, shape index: {}]
  %s1 = inlined_call_operand.hbm [shape: f32[8,128], index: 1, kind: output, shape index: {}]
  %s2 = sld [smem:[#allocation0]]
  $region18: #{tpu_custom_call.1} parent=0
    _
  %s4 = ssub.s32 1, %s2
  %s5 = scalar_select 0, %s4, %s2
  $region1: #{tpu_custom_call.1} parent=0
    #allocation2 [shape = 'u8[4096]{0}', space=vmem, size = 0x1000, scoped, tag = 'input window, operand 0, single buffered']
    #allocation3 [shape = 's32[1]{0}', space=sflag, size = 0x4, scoped, tag = 'scoped memory for tpu_custom_call.1']
    #allocation4 [shape = 's32[1]{0}', space=sflag, size = 0x4, scoped, tag = 'scoped memory for tpu_custom_call.1']
    #allocation5 [shape = 'u8[4096]{0}', space=vmem, size = 0x1000, scoped, tag = 'output window, operand 0, single buffered']
    %6 = vsyncpa [#allocation3], 0
    %7 = vsyncpa [#allocation4], 0
    // Predicated region
    $region2: #{tpu_custom_call.1} parent=1 // pred_check
      _
    $region3: #{tpu_custom_call.1} parent=1 // pred_check_branch
      %9 = sbr.rel (0) target = $region5
    $region4: #{tpu_custom_call.1} parent=1 // pred_region
      %s11 = ssub.s32 128, 128
      %12 = vsyncadd [#allocation3], %s11
      %s14 = sshll.u32 [#allocation2], 4
      %s15 = int_to_ptr.vmem [resolvable:$true] %s14
      %17 = dma.hbm_to_vmem [thread:$0]  %s0, 128, %s15, [#allocation3]
    $region5: #{tpu_custom_call.1} parent=1 // pred_fallthru
      _
    // Predicated region
    $region6: #{tpu_custom_call.1} parent=1 // pred_check
      _
    $region7: #{tpu_custom_call.1} parent=1 // pred_check_branch
      %19 = sbr.rel (0) target = $region9
    $region8: #{tpu_custom_call.1} parent=1 // pred_region
      %20 = dma.done [#allocation3], 128
    $region9: #{tpu_custom_call.1} parent=1 // pred_fallthru
      _
    %v21 = vld [vmem:[#allocation2] sm:$0xff]
    %22 = vrot.lane.b32.xlu0 %v21, 1
    %v23 = vpop.permute.xlu0 %22
    %24 = vst [vmem:[#allocation5] sm:$0xff] %v23
    // Predicated region
    $region10: #{tpu_custom_call.1} parent=1 // pred_check
      _
    $region11: #{tpu_custom_call.1} parent=1 // pred_check_branch
      %26 = sbr.rel (0) target = $region13
    $region12: #{tpu_custom_call.1} parent=1 // pred_region
      %s28 = ssub.s32 128, 128
      %29 = vsyncadd [#allocation4], %s28
      %s31 = sshll.u32 [#allocation5], 4
      %s32 = int_to_ptr.vmem [resolvable:$true] %s31
      %34 = dma.vmem_to_hbm [thread:$0]  %s32, 128, %s1, [#allocation4]
    $region13: #{tpu_custom_call.1} parent=1 // pred_fallthru
      _
    // Predicated region
    $region14: #{tpu_custom_call.1} parent=1 // pred_check
      _
    $region15: #{tpu_custom_call.1} parent=1 // pred_check_branch
      %36 = sbr.rel (0) target = $region17
    $region16: #{tpu_custom_call.1} parent=1 // pred_region
      %37 = dma.done [#allocation4], 128
    $region17: #{tpu_custom_call.1} parent=1 // pred_fallthru
      _
    %38 = vsyncpa [#allocation3], 1
    %39 = vsyncpa [#allocation4], 1

</llo_original>
